<compile_context>
chip_gen: v7x
topology: tpu7x:2x2x1
jax: 0.10.0
libtpu: 0.0.40
codegen_flags: <defaults>
</compile_context>

<pallas_src>
import jax
import jax.numpy as jnp
from jax.experimental import pallas as pl
from jax.experimental.pallas import tpu as pltpu

K = 3  # kernel size of the ConvTranspose2d


# --------------------------------------------------------------------------- #
# weight packing: ConvTranspose2d weight -> fused sub-pixel matmul weight
# --------------------------------------------------------------------------- #
def _pack_subpixel_weights(w_t, b, compute_dtype=None):
    """(Cin, Cout, 3, 3) -> (4*Cin, 4*Cout) fused sub-pixel weight.

    y[2m+py, 2n+px] = sum_{ry,rx in {0,1}} x[m+ry, n+rx] @ w_t[:, :, ky, kx]
    with ky = 1 + py - 2*ry, kx = 1 + px - 2*rx (taps outside [0,3) are zero).

    Rows = 4 blocks of Cin  for taps   [x(m,n), x(m,n+1), x(m+1,n), x(m+1,n+1)]
    Cols = 4 blocks of Cout for phases [(py,px) = (0,0),(0,1),(1,0),(1,1)]
    """
    cin, cout = w_t.shape[0], w_t.shape[1]
    zero = jnp.zeros((cin, cout), w_t.dtype)
    rows = []
    for ry in (0, 1):
        for rx in (0, 1):
            cols = []
            for py in (0, 1):
                for px in (0, 1):
                    ky, kx = 1 + py - 2 * ry, 1 + px - 2 * rx
                    cols.append(w_t[:, :, ky, kx]
                                if 0 <= ky < K and 0 <= kx < K else zero)
            rows.append(jnp.concatenate(cols, axis=1))
    w_big = jnp.concatenate(rows, axis=0)                     # (4*Cin, 4*Cout)
    if compute_dtype is not None:
        w_big = w_big.astype(compute_dtype)
    b_big = jnp.tile(b, 4).reshape(1, 4 * cout).astype(jnp.float32)
    return w_big, b_big


# --------------------------------------------------------------------------- #
# VMEM accounting / tile selection
# --------------------------------------------------------------------------- #
def _step_vmem_bytes(th, w, cin, cout, in_bytes, cmp_bytes):
    """Per-grid-step VMEM: double-buffered DMA tiles + live intermediates."""
    inp = (th + 1) * (w + 1) * cin * in_bytes        # input DMA buffer
    outp = th * w * 4 * cout * in_bytes              # output DMA buffer
    wts = 4 * cin * 4 * cout * cmp_bytes + 4 * cout * 4
    p_buf = th * w * 4 * cin * cmp_bytes             # im2col patch (~4x input)
    taps = 4 * th * w * cin * cmp_bytes              # transient tap slices (ub)
    r_buf = th * w * 4 * cout * 4                    # f32 MXU result
    return 2 * (inp + outp + wts) + p_buf + taps + r_buf


def _vmem_capacity_bytes():
    try:
        return int(pltpu.get_tpu_info().vmem_capacity_bytes)
    except Exception:
        return 64 << 20  # v7x per-core capacity: safe lower bound for all gens


def _pick_tile_h(n, h, w, cin, cout, in_bytes, cmp_bytes, budget_bytes):
    """Largest divisor of H whose *full* per-step VMEM working set fits budget.

    NOTE: for prime/awkward H this degrades towards TH=1 (correct but slow)."""
    best = 1
    for th in range(1, h + 1):
        if h % th:
            continue
        if _step_vmem_bytes(th, w, cin, cout, in_bytes, cmp_bytes) <= budget_bytes:
            best = th
    # v7x shards "parallel" grid axes across its 2 TensorCores: keep >= 2 blocks.
    if n * (h // best) < 2:
        for th in range(best - 1, 0, -1):
            if h % th == 0:
                best = th
                break
    return best


# --------------------------------------------------------------------------- #
# Pallas kernel
# --------------------------------------------------------------------------- #
def _upsample2x_kernel(x_ref, w_ref, b_ref, o_ref):
    """x_ref: (1, TH+1, W+1, Cin)  zero-haloed input rows [t*TH, t*TH+TH]
       w_ref: (4*Cin, 4*Cout)      fused sub-pixel weights, cols = (py, px, c)
       b_ref: (1, 4*Cout)          f32 bias, tiled over the 4 phases
       o_ref: (1, TH, W, 4*Cout)   lane-dense, phase-major output
    """
    _, thp1, wp1, cin = x_ref.shape
    th, w = thp1 - 1, wp1 - 1
    cout4 = o_ref.shape[-1]

    x = x_ref[0]                                   # (TH+1, W+1, Cin)
    top, bot = x[:th], x[1:]                       # rows m / m+1 (halo included)

    # im2col over the 2x2 sub-pixel footprint -> (TH*W, 4*Cin)
    # tap order: [x(m,n), x(m,n+1), x(m+1,n), x(m+1,n+1)]
    p = jnp.concatenate(
        [top[:, :w], top[:, 1:], bot[:, :w], bot[:, 1:]], axis=-1
    ).reshape(th * w, 4 * cin).astype(w_ref.dtype)

    # single fused MXU matmul: all four output phases at once (f32 accumulate)
    r = jnp.dot(p, w_ref[...], preferred_element_type=jnp.float32)
    r = r + b_ref[...]

    # one lane-dense (unmasked) store; wrapper de-interleaves (py, px)
    o_ref[0] = r.reshape(th, w, cout4).astype(o_ref.dtype)


# --------------------------------------------------------------------------- #
# wrapper (NCHW in / NCHW out, matching the PyTorch module)
# --------------------------------------------------------------------------- #
def upsample_conv_transpose(x_nchw, w_t, b, *, tile_h=None, compute_dtype=None,
                            vmem_budget_bytes=None):
    """x_nchw: (N, Cin, H, W); w_t: (Cin, Cout, 3, 3) PyTorch ConvTranspose2d
    layout; b: (Cout,)  ->  (N, Cout, 2H, 2W)."""
    n, cin, h, w = x_nchw.shape
    cout = w_t.shape[1]
    in_bytes = x_nchw.dtype.itemsize
    cmp_bytes = jnp.dtype(compute_dtype).itemsize if compute_dtype else in_bytes

    w_big, b_big = _pack_subpixel_weights(w_t, b, compute_dtype)

    cap = _vmem_capacity_bytes()
    budget = vmem_budget_bytes or max(16 << 20, min(cap // 2, 80 << 20))
    th = tile_h or _pick_tile_h(n, h, w, cin, cout, in_bytes, cmp_bytes, budget)
    assert h % th == 0, (h, th)
    nt = h // th

    # NCHW -> NHWC, 1-row/1-col zero halo, and per-tile (TH+1)-row windows.
    # All three fuse into one XLA pass over the small input; windowing adds only
    # ~1/TH duplicated rows and removes the second DMA stream + in-kernel concat.
    x = jnp.transpose(x_nchw, (0, 2, 3, 1))
    x = jnp.pad(x, ((0, 0), (0, 1), (0, 1), (0, 0)))            # (N, H+1, W+1, Cin)
    row_idx = jnp.arange(nt)[:, None] * th + jnp.arange(th + 1)[None, :]
    x = x[:, row_idx].reshape(n * nt, th + 1, w + 1, cin)       # (N*NT, TH+1, W+1, Cin)

    step_bytes = _step_vmem_bytes(th, w, cin, cout, in_bytes, cmp_bytes)
    vmem_limit = int(min(cap - (8 << 20), max(32 << 20, step_bytes * 5 // 4)))

    out = pl.pallas_call(
        _upsample2x_kernel,
        out_shape=jax.ShapeDtypeStruct((n, h, w, 4 * cout), x_nchw.dtype),
        grid_spec=pltpu.PrefetchScalarGridSpec(
            num_scalar_prefetch=0,
            grid=(n, nt),
            in_specs=[
                # one overlapping (TH+1)-row window per grid step (pre-windowed)
                pl.BlockSpec((1, th + 1, w + 1, cin),
                             lambda b_, t: (b_ * nt + t, 0, 0, 0)),
                # weights / bias stay VMEM-resident across the grid
                pl.BlockSpec((4 * cin, 4 * cout), lambda b_, t: (0, 0)),
                pl.BlockSpec((1, 4 * cout), lambda b_, t: (0, 0)),
            ],
            out_specs=pl.BlockSpec((1, th, w, 4 * cout),
                                   lambda b_, t: (b_, t, 0, 0)),
        ),
        compiler_params=pltpu.CompilerParams(
            dimension_semantics=("parallel", "parallel"),
            vmem_limit_bytes=vmem_limit),
    )(x, w_big, b_big)

    # (b, m, n, (py, px, c)) -> NCHW (b, c, 2m+py, 2n+px)
    out = out.reshape(n, h, w, 2, 2, cout)
    out = jnp.transpose(out, (0, 5, 1, 3, 2, 4)).reshape(n, cout, 2 * h, 2 * w)
    return out


# --------------------------------------------------------------------------- #
# pure-JAX reference
# --------------------------------------------------------------------------- #
def _reference(x_nchw, w_t, b):
    """ConvTranspose2d(k=3, s=2, p=1, op=1) via lax.conv_general_dilated."""
    w_oihw = jnp.transpose(w_t[:, :, ::-1, ::-1], (1, 0, 2, 3))
    y = jax.lax.conv_general_dilated(
        x_nchw, w_oihw,
        window_strides=(1, 1),
        padding=((1, 2), (1, 2)),
        lhs_dilation=(2, 2),
        dimension_numbers=("NCHW", "OIHW", "NCHW"),
    )
    return y + b[None, :, None, None]


if __name__ == "__main__":
    key = jax.random.PRNGKey(0)
    N, Cin, H, W = 2, 4, 16, 16
    Cout = Cin // 2

    kx, kw, kb = jax.random.split(key, 3)
    x = jax.random.normal(kx, (N, Cin, H, W), dtype=jnp.float32)
    fan_in = Cin * K * K
    bound = 1.0 / (fan_in ** 0.5)
    w_t = jax.random.uniform(kw, (Cin, Cout, K, K),
                             minval=-bound, maxval=bound, dtype=jnp.float32)
    b = jax.random.uniform(kb, (Cout,),
                           minval=-bound, maxval=bound, dtype=jnp.float32)

    fwd = jax.jit(upsample_conv_transpose)
    out = jax.block_until_ready(fwd(x, w_t, b))
    ref = jax.block_until_ready(_reference(x, w_t, b))

    assert out.shape == (N, Cout, 2 * H, 2 * W), out.shape
    assert jnp.allclose(out, ref, atol=1e-5, rtol=1e-5), \
        float(jnp.max(jnp.abs(out - ref)))

    # also exercise the spatially-tiled path (cross-tile halo rows)
    out_tiled = jax.block_until_ready(
        jax.jit(lambda a, wt, bb: upsample_conv_transpose(a, wt, bb, tile_h=8))(
            x, w_t, b))
    assert jnp.allclose(out_tiled, ref, atol=1e-5, rtol=1e-5), \
        float(jnp.max(jnp.abs(out_tiled - ref)))

    print("KERNEL_OK")
</pallas_src>

<mosaic_0001>
module attributes {stable_mosaic.version = 11 : i64} {
  func.func @_upsample2x_kernel(%arg0: i32, %arg1: i32, %arg2: memref<1x17x17x4xf32, #tpu.memory_space<vmem>>, %arg3: memref<16x8xf32, #tpu.memory_space<vmem>>, %arg4: memref<1x8xf32, #tpu.memory_space<vmem>>, %arg5: memref<1x16x16x8xf32, #tpu.memory_space<vmem>>) attributes {dimension_semantics = [#tpu.dimension_semantics<parallel>, #tpu.dimension_semantics<parallel>], iteration_bounds = array<i64: 2, 1>, scalar_prefetch = 0 : i64, scratch_operands = 0 : i64, tpu.core_type = #tpu.core_type<tc>, window_params = [{transform_indices = @transform_0, window_bounds = array<i64: 1, 17, 17, 4>}, {pipeline_mode = #tpu.pipeline_mode<synchronous>, transform_indices = @transform_1, window_bounds = array<i64: 16, 8>}, {pipeline_mode = #tpu.pipeline_mode<synchronous>, transform_indices = @transform_2, window_bounds = array<i64: 1, 8>}, {transform_indices = @transform_3, window_bounds = array<i64: 1, 16, 16, 8>}]} {
    %c0 = arith.constant 0 : index
    %c0_0 = arith.constant 0 : index
    %c0_1 = arith.constant 0 : index
    %c0_2 = arith.constant 0 : index
    %0 = vector.load %arg2[%c0, %c0_0, %c0_1, %c0_2] : memref<1x17x17x4xf32, #tpu.memory_space<vmem>>, vector<1x17x17x4xf32>
    %1 = vector.shape_cast %0 : vector<1x17x17x4xf32> to vector<17x17x4xf32>
    %2 = vector.extract_strided_slice %1 {offsets = [0, 0, 0], sizes = [16, 17, 4], strides = [1, 1, 1]} : vector<17x17x4xf32> to vector<16x17x4xf32>
    %3 = vector.extract_strided_slice %1 {offsets = [1, 0, 0], sizes = [16, 17, 4], strides = [1, 1, 1]} : vector<17x17x4xf32> to vector<16x17x4xf32>
    %4 = vector.extract_strided_slice %2 {offsets = [0, 0, 0], sizes = [16, 16, 4], strides = [1, 1, 1]} : vector<16x17x4xf32> to vector<16x16x4xf32>
    %5 = vector.extract_strided_slice %2 {offsets = [0, 1, 0], sizes = [16, 16, 4], strides = [1, 1, 1]} : vector<16x17x4xf32> to vector<16x16x4xf32>
    %6 = vector.extract_strided_slice %3 {offsets = [0, 0, 0], sizes = [16, 16, 4], strides = [1, 1, 1]} : vector<16x17x4xf32> to vector<16x16x4xf32>
    %7 = vector.extract_strided_slice %3 {offsets = [0, 1, 0], sizes = [16, 16, 4], strides = [1, 1, 1]} : vector<16x17x4xf32> to vector<16x16x4xf32>
    %8 = tpu.concatenate %4, %5, %6, %7 in 2 : vector<16x16x4xf32>, vector<16x16x4xf32>, vector<16x16x4xf32>, vector<16x16x4xf32> -> vector<16x16x16xf32>
    %9 = vector.shape_cast %8 : vector<16x16x16xf32> to vector<256x16xf32>
    %c0_3 = arith.constant 0 : index
    %c0_4 = arith.constant 0 : index
    %10 = vector.load %arg3[%c0_3, %c0_4] : memref<16x8xf32, #tpu.memory_space<vmem>>, vector<16x8xf32>
    %cst = arith.constant dense<0.000000e+00> : vector<256x8xf32>
    %11 = tpu.matmul %9, %10, %cst {dimension_numbers = #tpu.dot_dimension_numbers<[1], [0], [0], [1], [0, 0, 1, 1], [], []>} : vector<256x16xf32>, vector<16x8xf32>, vector<256x8xf32> -> vector<256x8xf32>
    %c0_5 = arith.constant 0 : index
    %c0_6 = arith.constant 0 : index
    %12 = vector.load %arg4[%c0_5, %c0_6] : memref<1x8xf32, #tpu.memory_space<vmem>>, vector<1x8xf32>
    %13 = vector.broadcast %12 : vector<1x8xf32> to vector<256x8xf32>
    %14 = arith.addf %11, %13 : vector<256x8xf32>
    %15 = vector.shape_cast %14 : vector<256x8xf32> to vector<16x16x8xf32>
    %c0_7 = arith.constant 0 : index
    %c0_8 = arith.constant 0 : index
    %c0_9 = arith.constant 0 : index
    %c0_10 = arith.constant 0 : index
    %16 = vector.load %arg5[%c0_7, %c0_8, %c0_9, %c0_10] : memref<1x16x16x8xf32, #tpu.memory_space<vmem>>, vector<1x16x16x8xf32>
    %17 = vector.shape_cast %16 : vector<1x16x16x8xf32> to vector<16x16x8xf32>
    %18 = vector.shape_cast %15 : vector<16x16x8xf32> to vector<1x16x16x8xf32>
    tpu.vector_store %arg5[%c0_7, %c0_8, %c0_9, %c0_10], %18 {strides = array<i32>} : memref<1x16x16x8xf32, #tpu.memory_space<vmem>>, vector<1x16x16x8xf32>,
    return
  }
  func.func @transform_0(%arg0: i32, %arg1: i32) -> (i32, i32, i32, i32) {
    %c1_i32 = arith.constant 1 : i32
    %0 = arith.muli %arg0, %c1_i32 : i32
    %1 = arith.addi %0, %arg1 : i32
    %c0_i32 = arith.constant 0 : i32
    %c0_i32_0 = arith.constant 0 : i32
    %c0_i32_1 = arith.constant 0 : i32
    %c0_i32_2 = arith.constant 0 : i32
    return %1, %c0_i32, %c0_i32_0, %c0_i32_1 : i32, i32, i32, i32
  }
  func.func @transform_1(%arg0: i32, %arg1: i32) -> (i32, i32) {
    %c0_i32 = arith.constant 0 : i32
    %c0_i32_0 = arith.constant 0 : i32
    %c0_i32_1 = arith.constant 0 : i32
    return %c0_i32, %c0_i32_0 : i32, i32
  }
  func.func @transform_2(%arg0: i32, %arg1: i32) -> (i32, i32) {
    %c0_i32 = arith.constant 0 : i32
    %c0_i32_0 = arith.constant 0 : i32
    %c0_i32_1 = arith.constant 0 : i32
    return %c0_i32, %c0_i32_0 : i32, i32
  }
  func.func @transform_3(%arg0: i32, %arg1: i32) -> (i32, i32, i32, i32) {
    %c0_i32 = arith.constant 0 : i32
    %c0_i32_0 = arith.constant 0 : i32
    %c0_i32_1 = arith.constant 0 : i32
    return %arg0, %arg1, %c0_i32, %c0_i32_0 : i32, i32, i32, i32
  }
}

</mosaic_0001>

<llo_original>
// kernel: tile.8
$region0: #{tile.8}
  #allocation0 [shape = 's32[1]{0}', space=sflag, size = 0x4, scoped, tag = 'scoped memory for tile.8']
  %s0 = inlined_call_operand.vmem [shape: f32[2], index: 0, kind: input, shape index: {}]
  %s1 = inlined_call_operand.vmem [shape: f32[4,2], index: 1, kind: output, shape index: {}]
  // Predicated region
  $region2: #{tile.8} parent=0 // pred_check
    _
  $region3: #{tile.8} parent=0 // pred_check_branch
    %3 = sbr.rel (0) target = $region5
  $region4: #{tile.8} parent=0 // pred_region
    _
  $region5: #{tile.8} parent=0 // pred_fallthru
    _
  %v4 = vld [vmem:[%s0] ss:$0 sm:$0xff]
  %5 = vst [vmem:[%s1] sm:$0xf] %v4

// kernel: tile.9
$region0: #{tile.9}
  %s0 = inlined_call_operand.vmem [shape: f32[4,2], index: 0, kind: input, shape index: {}]
  %s1 = inlined_call_operand.vmem [shape: f32[1,8], index: 1, kind: output, shape index: {}]
  $region1: #{tile.9} parent=0
    #allocation0 [shape = 'u8[4096]{0}', space=vmem, size = 0x1000, scoped, tag = 'scoped mem for output reshape']
    #allocation1 [shape = 'u8[4096]{0}', space=vmem, size = 0x1000, scoped, tag = 'scoped mem for input reshape']
    %s3 = sshllo.u32 0, 4
    %v4 = vld [vmem:[%s0] sm:%s3]
    %5 = vst [vmem:[#allocation1] sm:%s3] %v4
    %v6 = vld [vmem:[#allocation1] sm:$0x1]
    %vm7 = vcmask 15360
    %8 = vst.msk [vmem:[#allocation0] sm:$0x1] %vm7, %v6
    %s9 = scalar_lea.vmem [#allocation1], 3
    %v10 = vld [vmem:[%s9] sm:$0x1]
    %11 = vrot.lane.b32.xlu0 %v10, 6
    %v12 = vpop.permute.xlu0 %11
    %vm13 = vcmask 64560
    %14 = vst.msk [vmem:[#allocation0] sm:$0x1] %vm13, %v12
    %s15 = scalar_lea.vmem [#allocation1], 2
    %v16 = vld [vmem:[%s15] sm:$0x1]
    %17 = vrot.lane.b32.xlu0 %v16, 4
    %v18 = vpop.permute.xlu0 %17
    %vm19 = vcmask 48160
    %20 = vst.msk [vmem:[#allocation0] sm:$0x1] %vm19, %v18
    %s21 = scalar_lea.vmem [#allocation1], 1
    %v22 = vld [vmem:[%s21] sm:$0x1]
    %23 = vrot.lane.b32.xlu0 %v22, 2
    %v24 = vpop.permute.xlu0 %23
    %vm25 = vcmask 31760
    %26 = vst.msk [vmem:[#allocation0] sm:$0x1] %vm25, %v24
    %s28 = sshllo.u32 0, 1
    %v30 = vld [vmem:[#allocation0] sm:%s28]
    %s31 = sshllo.u32 0, 1
    %32 = vst [vmem:[%s1] sm:%s31] %v30

// kernel: upsample_conv_transpose.1
$region0: #{upsample_conv_transpose.1}
  #allocation0 [shape = 'u32[]', space=smem, size = 0x4, offset = 0x4, fixed_abs, tag = 'smem constant byte address 0x4 - core index']
  #allocation1 [shape = 'u32[144,128]{1,0:T(1,128)}', space=vmem, size = 0x12000, scoped, tag = 'internal scratch']
  %s0 = inlined_call_operand.vmem [shape: f32[2,17,17,4], index: 0, kind: input, shape index: {}]
  %s1 = inlined_call_operand.vmem [shape: f32[16,8], index: 1, kind: input, shape index: {}]
  %s2 = inlined_call_operand.vmem [shape: f32[1,8], index: 2, kind: input, shape index: {}]
  %s3 = inlined_call_operand.vmem [shape: f32[2,16,16,8], index: 3, kind: output, shape index: {}]
  %s4 = sld [smem:[#allocation0]]
  $region45: #{upsample_conv_transpose.1} parent=0
    _
  %s6 = ssub.s32 1, %s4
  %s7 = scalar_select 0, %s6, %s4
  loop: start=0, step=1, limit=4
  $region2: #{upsample_conv_transpose.1} parent=0 // loop_pre_header
    _
  $region3: #{upsample_conv_transpose.1} parent=0 // loop_header
    %s9 = sphi 0, %s13
    %p10 = scmp.ge.s32.totalorder %s9, 4
    %s16 = sphi 0, %s28
    %s17 = sphi 0, %s24
    %s18 = sphi 0, %s16
    %s19 = sphi 0, %s17
    %s20 = sphi 0, %s18
    %s21 = sphi 0, %s19
    %s33 = sphi 0, %s35
    %s36 = sphi 0, %s33
    %s37 = sphi 0, %s36
    %s53 = sphi 0, %s37
    %s57 = sphi 0, %s57
    %s59 = sphi 0, %s57
    %s60 = sphi 0, %s59
    %s74 = sphi 0, %s60
    %s78 = sphi 0, %s78
    %s80 = sphi 0, %s78
    %s81 = sphi 0, %s80
    %s95 = sphi 0, %s81
    %s103 = sphi 0, %s105
    %s106 = sphi 0, %s103
    %s107 = sphi 0, %s106
    %s123 = sphi 0, %s107
  $region4: #{upsample_conv_transpose.1} parent=0 // loop_header_branch
    %12 = sbr.rel (%p10) target = $region8
  $region5: #{upsample_conv_transpose.1} parent=0 // loop_body
    %s14 = ssub.s32 %s9, 1
    %s15 = ssub.s32 %s9, 2
    %s22 = sadd.s32 1, %s17
    %p23 = scmp.ge.s32.totalorder %s22, 1
    %s24 = scalar_select %p23, 0, %s22
    %s25 = sadd.s32 1, %s16
    %s26 = scalar_select %p23, %s25, %s16
    %p27 = scmp.ge.s32.totalorder %s26, 2
    %s28 = scalar_select %p27, 0, %s26
    %s29 = sadd.s32 %s16, %s17
    %s30 = sadd.s32 %s28, %s24
    %s31 = ssub.s32 %s29, %s30
    %p32 = scmp.eq.s32.totalorder %s31, 0
    %s34 = sadd.s32 %s33, 1
    %s35 = scalar_select %p32, %s33, %s34
    %p38 = pneg %p32
    %p39 = scmp.eq.s32.totalorder %s9, 1
    %p40 = por %p38, %p39
    %p41 = scmp.ne.s32.totalorder %s33, %s36
    %p42 = scmp.eq.s32.totalorder %s9, 0
    %p43 = por %p41, %p42
    %p44 = scmp.ne.s32.totalorder %s33, %s36
    %p45 = scmp.eq.s32.totalorder %s14, 1
    %p46 = por %p44, %p45
    %p47 = scmp.ne.s32.totalorder %s36, %s37
    %p48 = scmp.eq.s32.totalorder %s14, 0
    %p49 = por %p47, %p48
    %p50 = scmp.ne.s32.totalorder %s36, %s37
    %p51 = scmp.eq.s32.totalorder %s15, 1
    %p52 = por %p50, %p51
    %p54 = scmp.ne.s32.totalorder %s37, %s53
    %p55 = scmp.eq.s32.totalorder %s15, 0
    %p56 = por %p54, %p55
    %s58 = sadd.s32 %s57, 1
    %p61 = scmp.eq.s32.totalorder %s9, 1
    %p62 = scmp.ne.s32.totalorder %s57, %s59
    %p63 = scmp.eq.s32.totalorder %s9, 0
    %p64 = por %p62, %p63
    %p65 = scmp.ne.s32.totalorder %s57, %s59
    %p66 = scmp.eq.s32.totalorder %s14, 1
    %p67 = por %p65, %p66
    %p68 = scmp.ne.s32.totalorder %s59, %s60
    %p69 = scmp.eq.s32.totalorder %s14, 0
    %p70 = por %p68, %p69
    %p71 = scmp.ne.s32.totalorder %s59, %s60
    %p72 = scmp.eq.s32.totalorder %s15, 1
    %p73 = por %p71, %p72
    %p75 = scmp.ne.s32.totalorder %s60, %s74
    %p76 = scmp.eq.s32.totalorder %s15, 0
    %p77 = por %p75, %p76
    %s79 = sadd.s32 %s78, 1
    %p82 = scmp.eq.s32.totalorder %s9, 1
    %p83 = scmp.ne.s32.totalorder %s78, %s80
    %p84 = scmp.eq.s32.totalorder %s9, 0
    %p85 = por %p83, %p84
    %p86 = scmp.ne.s32.totalorder %s78, %s80
    %p87 = scmp.eq.s32.totalorder %s14, 1
    %p88 = por %p86, %p87
    %p89 = scmp.ne.s32.totalorder %s80, %s81
    %p90 = scmp.eq.s32.totalorder %s14, 0
    %p91 = por %p89, %p90
    %p92 = scmp.ne.s32.totalorder %s80, %s81
    %p93 = scmp.eq.s32.totalorder %s15, 1
    %p94 = por %p92, %p93
    %p96 = scmp.ne.s32.totalorder %s81, %s95
    %p97 = scmp.eq.s32.totalorder %s15, 0
    %p98 = por %p96, %p97
    %s99 = ssub.s32 %s16, %s28
    %s100 = ssub.s32 %s17, %s24
    %s101 = sor.u32 %s99, %s100
    %p102 = scmp.eq.s32.totalorder %s101, 0
    %s104 = sadd.s32 %s103, 1
    %s105 = scalar_select %p102, %s103, %s104
    %p108 = pneg %p102
    %p109 = scmp.eq.s32.totalorder %s9, 1
    %p110 = por %p108, %p109
    %p111 = scmp.ne.s32.totalorder %s103, %s106
    %p112 = scmp.eq.s32.totalorder %s9, 0
    %p113 = por %p111, %p112
    %p114 = scmp.ne.s32.totalorder %s103, %s106
    %p115 = scmp.eq.s32.totalorder %s14, 1
    %p116 = por %p114, %p115
    %p117 = scmp.ne.s32.totalorder %s106, %s107
    %p118 = scmp.eq.s32.totalorder %s14, 0
    %p119 = por %p117, %p118
    %p120 = scmp.ne.s32.totalorder %s106, %s107
    %p121 = scmp.eq.s32.totalorder %s15, 1
    %p122 = por %p120, %p121
    %p124 = scmp.ne.s32.totalorder %s107, %s123
    %p125 = scmp.eq.s32.totalorder %s15, 0
    %p126 = por %p124, %p125
    %p127 = scmp.le.s32.totalorder 1, %s9
    %p128 = scmp.lt.s32.totalorder %s9, 3
    %p129 = pnand %p127, %p128
    %p130 = pneg %p129
    // Predicated region
    $region9: #{upsample_conv_transpose.1} parent=5 // pred_check
      _
    $region10: #{upsample_conv_transpose.1} parent=5 // pred_check_branch
      %132 = sbr.rel (%p129) target = $region12
    $region11: #{upsample_conv_transpose.1} parent=5 // pred_region
      %s133 = ssub.s32 %s9, 1
      // Predicated region
      $region13: #{upsample_conv_transpose.1} parent=11 // pred_check
        %p134 = pneg %p70
      $region14: #{upsample_conv_transpose.1} parent=11 // pred_check_branch
        %136 = sbr.rel (%p134) target = $region16
      $region15: #{upsample_conv_transpose.1} parent=11 // pred_region
        _
      $region16: #{upsample_conv_transpose.1} parent=11 // pred_fallthru
        _
      // Predicated region
      $region17: #{upsample_conv_transpose.1} parent=11 // pred_check
        %p137 = pneg %p91
      $region18: #{upsample_conv_transpose.1} parent=11 // pred_check_branch
        %139 = sbr.rel (%p137) target = $region20
      $region19: #{upsample_conv_transpose.1} parent=11 // pred_region
        _
      $region20: #{upsample_conv_transpose.1} parent=11 // pred_fallthru
        _
    $region12: #{upsample_conv_transpose.1} parent=5 // pred_fallthru
      _
    %p140 = scmp.lt.s32.totalorder %s9, 2
    // Predicated region
    $region21: #{upsample_conv_transpose.1} parent=5 // pred_check
      %p141 = pneg %p140
    $region22: #{upsample_conv_transpose.1} parent=5 // pred_check_branch
      %143 = sbr.rel (%p141) target = $region24
    $region23: #{upsample_conv_transpose.1} parent=5 // pred_region
      // Predicated region
      $region25: #{upsample_conv_transpose.1} parent=23 // pred_check
        %p144 = pneg %p43
      $region26: #{upsample_conv_transpose.1} parent=23 // pred_check_branch
        %146 = sbr.rel (%p144) target = $region28
      $region27: #{upsample_conv_transpose.1} parent=23 // pred_region
        %s147 = sadd.s32 %s16, %s17
        %p148 = scmp.lt.s32.totalorder %s147, 1
        %s149 = scalar_select %p148, %s147, 1
        %s150 = smul.addr %s149, 51
        %s151 = smul.addr %s150, 8
        %s152 = scalar_lea.vmem %s0, %s151
        %s153 = sadd.s32 %s16, %s17
      $region28: #{upsample_conv_transpose.1} parent=23 // pred_fallthru
        _
    $region24: #{upsample_conv_transpose.1} parent=5 // pred_fallthru
      _
    %p154 = scmp.le.s32.totalorder 1, %s9
    %p155 = scmp.lt.s32.totalorder %s9, 3
    %p156 = pnand %p154, %p155
    %p157 = pneg %p156
    // Predicated region
    $region29: #{upsample_conv_transpose.1} parent=5 // pred_check
      _
    $region30: #{upsample_conv_transpose.1} parent=5 // pred_check_branch
      %159 = sbr.rel (%p156) target = $region32
    $region31: #{upsample_conv_transpose.1} parent=5 // pred_region
      %s160 = ssub.s32 %s9, 1
      %s161 = sadd.s32 %s18, %s19
      %p162 = scmp.lt.s32.totalorder %s161, 1
      %s163 = scalar_select %p162, %s161, 1
      %s164 = smul.addr %s163, 51
      %s165 = smul.addr %s164, 8
      %s166 = scalar_lea.vmem %s0, %s165
      %p167 = pneg %p49
      %p168 = pneg %p46
      %p169 = pneg %p70
      %p170 = pneg %p67
      %p171 = pneg %p91
      %p172 = pneg %p88
      %p173 = pneg %p119
      %p174 = pneg %p116
      %s175 = smul.u32 16, %s19
      %p176 = scmp.lt.s32.totalorder %s18, 1
      %s177 = scalar_select %p176, %s18, 1
      %p178 = scmp.lt.s32.totalorder %s175, 15
      %s179 = scalar_select %p178, %s175, 15
      %s180 = smul.addr %s179, 2
      %s181 = smul.addr %s177, 32
      %s182 = sadd.s32 %s180, %s181
      %s183 = smul.addr %s182, 8
      %s184 = scalar_lea.vmem %s3, %s183
      %s185 = sadd.s32 %s18, %s19
      %p186 = scmp.lt.s32.totalorder %s185, 1
      %s187 = scalar_select %p186, %s185, 1
      %s188 = smul.addr %s187, 51
      %s189 = smul.addr %s188, 8
      %s190 = scalar_lea.vmem %s0, %s189
      %s191 = sadd.s32 %s18, %s19
      %s192 = smul.u32 16, %s19
      %p193 = scmp.lt.s32.totalorder %s18, 1
      %s194 = scalar_select %p193, %s18, 1
      %p195 = scmp.lt.s32.totalorder %s192, 15
      %s196 = scalar_select %p195, %s192, 15
      %s197 = smul.addr %s196, 2
      %s198 = smul.addr %s194, 32
      %s199 = sadd.s32 %s197, %s198
      %s200 = smul.addr %s199, 8
      %s201 = scalar_lea.vmem %s3, %s200
      %s202 = smul.u32 16, %s19
      %v203 = vld [vmem:[%s190] sm:$0xff]
      %v204 = vld [vmem:[%s190 + $0x8] sm:$0xff]
      %v205 = vld [vmem:[%s190 + $0x10] sm:$0x1]
      %v206 = vld [vmem:[%s190 + $0x18] sm:$0xff]
      %v207 = vld [vmem:[%s190 + $0x20] sm:$0xff]
      %v208 = vld [vmem:[%s190 + $0x28] sm:$0x1]
      %v209 = vld [vmem:[%s190 + $0x30] sm:$0xff]
      %v210 = vld [vmem:[%s190 + $0x38] sm:$0xff]
      %v211 = vld [vmem:[%s190 + $0x40] sm:$0x1]
      %v212 = vld [vmem:[%s190 + $0x48] sm:$0xff]
      %v213 = vld [vmem:[%s190 + $0x50] sm:$0xff]
      %v214 = vld [vmem:[%s190 + $0x58] sm:$0x1]
      %v215 = vld [vmem:[%s190 + $0x60] sm:$0xff]
      %v216 = vld [vmem:[%s190 + $0x68] sm:$0xff]
      %v217 = vld [vmem:[%s190 + $0x70] sm:$0x1]
      %v218 = vld [vmem:[%s190 + $0x78] sm:$0xff]
      %v219 = vld [vmem:[%s190 + $0x80] sm:$0xff]
      %v220 = vld [vmem:[%s190 + $0x88] sm:$0x1]
      %v221 = vld [vmem:[%s190 + $0x90] sm:$0xff]
      %v222 = vld [vmem:[%s190 + $0x98] sm:$0xff]
      %v223 = vld [vmem:[%s190 + $0xa0] sm:$0x1]
      %v224 = vld [vmem:[%s190 + $0xa8] sm:$0xff]
      %v225 = vld [vmem:[%s190 + $0xb0] sm:$0xff]
      %v226 = vld [vmem:[%s190 + $0xb8] sm:$0x1]
      %v227 = vld [vmem:[%s190 + $0xc0] sm:$0xff]
      %v228 = vld [vmem:[%s190 + $0xc8] sm:$0xff]
      %v229 = vld [vmem:[%s190 + $0xd0] sm:$0x1]
      %v230 = vld [vmem:[%s190 + $0xd8] sm:$0xff]
      %v231 = vld [vmem:[%s190 + $0xe0] sm:$0xff]
      %v232 = vld [vmem:[%s190 + $0xe8] sm:$0x1]
      %v233 = vld [vmem:[%s190 + $0xf0] sm:$0xff]
      %v234 = vld [vmem:[%s190 + $0xf8] sm:$0xff]
      %v235 = vld [vmem:[%s190 + $0x100] sm:$0x1]
      %v236 = vld [vmem:[%s190 + $0x108] sm:$0xff]
      %v237 = vld [vmem:[%s190 + $0x110] sm:$0xff]
      %v238 = vld [vmem:[%s190 + $0x118] sm:$0x1]
      %v239 = vld [vmem:[%s190 + $0x120] sm:$0xff]
      %v240 = vld [vmem:[%s190 + $0x128] sm:$0xff]
      %v241 = vld [vmem:[%s190 + $0x130] sm:$0x1]
      %v242 = vld [vmem:[%s190 + $0x138] sm:$0xff]
      %v243 = vld [vmem:[%s190 + $0x140] sm:$0xff]
      %v244 = vld [vmem:[%s190 + $0x148] sm:$0x1]
      %v245 = vld [vmem:[%s190 + $0x150] sm:$0xff]
      %v246 = vld [vmem:[%s190 + $0x158] sm:$0xff]
      %v247 = vld [vmem:[%s190 + $0x160] sm:$0x1]
      %v248 = vld [vmem:[%s190 + $0x168] sm:$0xff]
      %v249 = vld [vmem:[%s190 + $0x170] sm:$0xff]
      %v250 = vld [vmem:[%s190 + $0x178] sm:$0x1]
      %v251 = vld [vmem:[%s190 + $0x180] sm:$0xff]
      %v252 = vld [vmem:[%s190 + $0x188] sm:$0xff]
      %v253 = vld [vmem:[%s190 + $0x190] sm:$0x1]
      %vm302 = vcmask 1046528
      %v303 = vrot.slane %v203, 1
      %v304 = vrot.slane %v204, 1
      %v305 = vsel %vm302, %v303, %v304
      %v306 = vrot.slane %v205, 1
      %v307 = vsel %vm302, %v304, %v306
      %v308 = vrot.slane %v206, 1
      %v309 = vrot.slane %v207, 1
      %v310 = vsel %vm302, %v308, %v309
      %v311 = vrot.slane %v208, 1
      %v312 = vsel %vm302, %v309, %v311
      %v313 = vrot.slane %v209, 1
      %v314 = vrot.slane %v210, 1
      %v315 = vsel %vm302, %v313, %v314
      %v316 = vrot.slane %v211, 1
      %v317 = vsel %vm302, %v314, %v316
      %v318 = vrot.slane %v212, 1
      %v319 = vrot.slane %v213, 1
      %v320 = vsel %vm302, %v318, %v319
      %v321 = vrot.slane %v214, 1
      %v322 = vsel %vm302, %v319, %v321
      %v323 = vrot.slane %v215, 1
      %v324 = vrot.slane %v216, 1
      %v325 = vsel %vm302, %v323, %v324
      %v326 = vrot.slane %v217, 1
      %v327 = vsel %vm302, %v324, %v326
      %v328 = vrot.slane %v218, 1
      %v329 = vrot.slane %v219, 1
      %v330 = vsel %vm302, %v328, %v329
      %v331 = vrot.slane %v220, 1
      %v332 = vsel %vm302, %v329, %v331
      %v333 = vrot.slane %v221, 1
      %v334 = vrot.slane %v222, 1
      %v335 = vsel %vm302, %v333, %v334
      %v336 = vrot.slane %v223, 1
      %v337 = vsel %vm302, %v334, %v336
      %v338 = vrot.slane %v224, 1
      %v339 = vrot.slane %v225, 1
      %v340 = vsel %vm302, %v338, %v339
      %v341 = vrot.slane %v226, 1
      %v342 = vsel %vm302, %v339, %v341
      %v343 = vrot.slane %v227, 1
      %v344 = vrot.slane %v228, 1
      %v345 = vsel %vm302, %v343, %v344
      %v346 = vrot.slane %v229, 1
      %v347 = vsel %vm302, %v344, %v346
      %v348 = vrot.slane %v230, 1
      %v349 = vrot.slane %v231, 1
      %v350 = vsel %vm302, %v348, %v349
      %v351 = vrot.slane %v232, 1
      %v352 = vsel %vm302, %v349, %v351
      %v353 = vrot.slane %v233, 1
      %v354 = vrot.slane %v234, 1
      %v355 = vsel %vm302, %v353, %v354
      %v356 = vrot.slane %v235, 1
      %v357 = vsel %vm302, %v354, %v356
      %v358 = vrot.slane %v236, 1
      %v359 = vrot.slane %v237, 1
      %v360 = vsel %vm302, %v358, %v359
      %v361 = vrot.slane %v238, 1
      %v362 = vsel %vm302, %v359, %v361
      %v363 = vrot.slane %v239, 1
      %v364 = vrot.slane %v240, 1
      %v365 = vsel %vm302, %v363, %v364
      %v366 = vrot.slane %v241, 1
      %v367 = vsel %vm302, %v364, %v366
      %v368 = vrot.slane %v242, 1
      %v369 = vrot.slane %v243, 1
      %v370 = vsel %vm302, %v368, %v369
      %v371 = vrot.slane %v244, 1
      %v372 = vsel %vm302, %v369, %v371
      %v373 = vrot.slane %v245, 1
      %v374 = vrot.slane %v246, 1
      %v375 = vsel %vm302, %v373, %v374
      %v376 = vrot.slane %v247, 1
      %v377 = vsel %vm302, %v374, %v376
      %v378 = vrot.slane %v248, 1
      %v379 = vrot.slane %v249, 1
      %v380 = vsel %vm302, %v378, %v379
      %v381 = vrot.slane %v250, 1
      %v382 = vsel %vm302, %v379, %v381
      %383 = vrot.lane.b32.xlu0 %v305, 4
      %v384 = vpop.permute.xlu0 %383
      %385 = vrot.lane.b32.xlu0 %v307, 4
      %v386 = vpop.permute.xlu0 %385
      %387 = vrot.lane.b32.xlu0 %v310, 4
      %v388 = vpop.permute.xlu0 %387
      %389 = vrot.lane.b32.xlu0 %v312, 4
      %v390 = vpop.permute.xlu0 %389
      %391 = vrot.lane.b32.xlu0 %v315, 4
      %v392 = vpop.permute.xlu0 %391
      %393 = vrot.lane.b32.xlu0 %v317, 4
      %v394 = vpop.permute.xlu0 %393
      %395 = vrot.lane.b32.xlu0 %v320, 4
      %v396 = vpop.permute.xlu0 %395
      %397 = vrot.lane.b32.xlu0 %v322, 4
      %v398 = vpop.permute.xlu0 %397
      %399 = vrot.lane.b32.xlu0 %v325, 4
      %v400 = vpop.permute.xlu0 %399
      %401 = vrot.lane.b32.xlu0 %v327, 4
      %v402 = vpop.permute.xlu0 %401
      %403 = vrot.lane.b32.xlu0 %v330, 4
      %v404 = vpop.permute.xlu0 %403
      %405 = vrot.lane.b32.xlu0 %v332, 4
      %v406 = vpop.permute.xlu0 %405
      %407 = vrot.lane.b32.xlu0 %v335, 4
      %v408 = vpop.permute.xlu0 %407
      %409 = vrot.lane.b32.xlu0 %v337, 4
      %v410 = vpop.permute.xlu0 %409
      %411 = vrot.lane.b32.xlu0 %v340, 4
      %v412 = vpop.permute.xlu0 %411
      %413 = vrot.lane.b32.xlu0 %v342, 4
      %v414 = vpop.permute.xlu0 %413
      %415 = vrot.lane.b32.xlu0 %v345, 4
      %v416 = vpop.permute.xlu0 %415
      %417 = vrot.lane.b32.xlu0 %v347, 4
      %v418 = vpop.permute.xlu0 %417
      %419 = vrot.lane.b32.xlu0 %v350, 4
      %v420 = vpop.permute.xlu0 %419
      %421 = vrot.lane.b32.xlu0 %v352, 4
      %v422 = vpop.permute.xlu0 %421
      %423 = vrot.lane.b32.xlu0 %v355, 4
      %v424 = vpop.permute.xlu0 %423
      %425 = vrot.lane.b32.xlu0 %v357, 4
      %v426 = vpop.permute.xlu0 %425
      %427 = vrot.lane.b32.xlu0 %v360, 4
      %v428 = vpop.permute.xlu0 %427
      %429 = vrot.lane.b32.xlu0 %v362, 4
      %v430 = vpop.permute.xlu0 %429
      %431 = vrot.lane.b32.xlu0 %v365, 4
      %v432 = vpop.permute.xlu0 %431
      %433 = vrot.lane.b32.xlu0 %v367, 4
      %v434 = vpop.permute.xlu0 %433
      %435 = vrot.lane.b32.xlu0 %v370, 4
      %v436 = vpop.permute.xlu0 %435
      %437 = vrot.lane.b32.xlu0 %v372, 4
      %v438 = vpop.permute.xlu0 %437
      %439 = vrot.lane.b32.xlu0 %v375, 4
      %v440 = vpop.permute.xlu0 %439
      %441 = vrot.lane.b32.xlu0 %v377, 4
      %v442 = vpop.permute.xlu0 %441
      %443 = vrot.lane.b32.xlu0 %v380, 4
      %v444 = vpop.permute.xlu0 %443
      %445 = vrot.lane.b32.xlu0 %v382, 4
      %v446 = vpop.permute.xlu0 %445
      %481 = vrot.lane.b32.xlu0 %v206, 8
      %v482 = vpop.permute.xlu0 %481
      %483 = vrot.lane.b32.xlu0 %v207, 8
      %v484 = vpop.permute.xlu0 %483
      %485 = vrot.lane.b32.xlu0 %v209, 8
      %v486 = vpop.permute.xlu0 %485
      %487 = vrot.lane.b32.xlu0 %v210, 8
      %v488 = vpop.permute.xlu0 %487
      %489 = vrot.lane.b32.xlu0 %v212, 8
      %v490 = vpop.permute.xlu0 %489
      %491 = vrot.lane.b32.xlu0 %v213, 8
      %v492 = vpop.permute.xlu0 %491
      %493 = vrot.lane.b32.xlu0 %v215, 8
      %v494 = vpop.permute.xlu0 %493
      %495 = vrot.lane.b32.xlu0 %v216, 8
      %v496 = vpop.permute.xlu0 %495
      %497 = vrot.lane.b32.xlu0 %v218, 8
      %v498 = vpop.permute.xlu0 %497
      %499 = vrot.lane.b32.xlu0 %v219, 8
      %v500 = vpop.permute.xlu0 %499
      %501 = vrot.lane.b32.xlu0 %v221, 8
      %v502 = vpop.permute.xlu0 %501
      %503 = vrot.lane.b32.xlu0 %v222, 8
      %v504 = vpop.permute.xlu0 %503
      %505 = vrot.lane.b32.xlu0 %v224, 8
      %v506 = vpop.permute.xlu0 %505
      %507 = vrot.lane.b32.xlu0 %v225, 8
      %v508 = vpop.permute.xlu0 %507
      %509 = vrot.lane.b32.xlu0 %v227, 8
      %v510 = vpop.permute.xlu0 %509
      %511 = vrot.lane.b32.xlu0 %v228, 8
      %v512 = vpop.permute.xlu0 %511
      %513 = vrot.lane.b32.xlu0 %v230, 8
      %v514 = vpop.permute.xlu0 %513
      %515 = vrot.lane.b32.xlu0 %v231, 8
      %v516 = vpop.permute.xlu0 %515
      %517 = vrot.lane.b32.xlu0 %v233, 8
      %v518 = vpop.permute.xlu0 %517
      %519 = vrot.lane.b32.xlu0 %v234, 8
      %v520 = vpop.permute.xlu0 %519
      %521 = vrot.lane.b32.xlu0 %v236, 8
      %v522 = vpop.permute.xlu0 %521
      %523 = vrot.lane.b32.xlu0 %v237, 8
      %v524 = vpop.permute.xlu0 %523
      %525 = vrot.lane.b32.xlu0 %v239, 8
      %v526 = vpop.permute.xlu0 %525
      %527 = vrot.lane.b32.xlu0 %v240, 8
      %v528 = vpop.permute.xlu0 %527
      %529 = vrot.lane.b32.xlu0 %v242, 8
      %v530 = vpop.permute.xlu0 %529
      %531 = vrot.lane.b32.xlu0 %v243, 8
      %v532 = vpop.permute.xlu0 %531
      %533 = vrot.lane.b32.xlu0 %v245, 8
      %v534 = vpop.permute.xlu0 %533
      %535 = vrot.lane.b32.xlu0 %v246, 8
      %v536 = vpop.permute.xlu0 %535
      %537 = vrot.lane.b32.xlu0 %v248, 8
      %v538 = vpop.permute.xlu0 %537
      %539 = vrot.lane.b32.xlu0 %v249, 8
      %v540 = vpop.permute.xlu0 %539
      %541 = vrot.lane.b32.xlu0 %v251, 8
      %v542 = vpop.permute.xlu0 %541
      %543 = vrot.lane.b32.xlu0 %v252, 8
      %v544 = vpop.permute.xlu0 %543
      %v578 = vrot.slane %v251, 1
      %v579 = vrot.slane %v252, 1
      %v580 = vsel %vm302, %v578, %v579
      %v581 = vrot.slane %v253, 1
      %v582 = vsel %vm302, %v579, %v581
      %583 = vrot.lane.b32.xlu0 %v310, 12
      %v584 = vpop.permute.xlu0 %583
      %585 = vrot.lane.b32.xlu0 %v312, 12
      %v586 = vpop.permute.xlu0 %585
      %587 = vrot.lane.b32.xlu0 %v315, 12
      %v588 = vpop.permute.xlu0 %587
      %589 = vrot.lane.b32.xlu0 %v317, 12
      %v590 = vpop.permute.xlu0 %589
      %591 = vrot.lane.b32.xlu0 %v320, 12
      %v592 = vpop.permute.xlu0 %591
      %593 = vrot.lane.b32.xlu0 %v322, 12
      %v594 = vpop.permute.xlu0 %593
      %595 = vrot.lane.b32.xlu0 %v325, 12
      %v596 = vpop.permute.xlu0 %595
      %597 = vrot.lane.b32.xlu0 %v327, 12
      %v598 = vpop.permute.xlu0 %597
      %599 = vrot.lane.b32.xlu0 %v330, 12
      %v600 = vpop.permute.xlu0 %599
      %601 = vrot.lane.b32.xlu0 %v332, 12
      %v602 = vpop.permute.xlu0 %601
      %603 = vrot.lane.b32.xlu0 %v335, 12
      %v604 = vpop.permute.xlu0 %603
      %605 = vrot.lane.b32.xlu0 %v337, 12
      %v606 = vpop.permute.xlu0 %605
      %607 = vrot.lane.b32.xlu0 %v340, 12
      %v608 = vpop.permute.xlu0 %607
      %609 = vrot.lane.b32.xlu0 %v342, 12
      %v610 = vpop.permute.xlu0 %609
      %611 = vrot.lane.b32.xlu0 %v345, 12
      %v612 = vpop.permute.xlu0 %611
      %613 = vrot.lane.b32.xlu0 %v347, 12
      %v614 = vpop.permute.xlu0 %613
      %615 = vrot.lane.b32.xlu0 %v350, 12
      %v616 = vpop.permute.xlu0 %615
      %617 = vrot.lane.b32.xlu0 %v352, 12
      %v618 = vpop.permute.xlu0 %617
      %619 = vrot.lane.b32.xlu0 %v355, 12
      %v620 = vpop.permute.xlu0 %619
      %621 = vrot.lane.b32.xlu0 %v357, 12
      %v622 = vpop.permute.xlu0 %621
      %623 = vrot.lane.b32.xlu0 %v360, 12
      %v624 = vpop.permute.xlu0 %623
      %625 = vrot.lane.b32.xlu0 %v362, 12
      %v626 = vpop.permute.xlu0 %625
      %627 = vrot.lane.b32.xlu0 %v365, 12
      %v628 = vpop.permute.xlu0 %627
      %629 = vrot.lane.b32.xlu0 %v367, 12
      %v630 = vpop.permute.xlu0 %629
      %631 = vrot.lane.b32.xlu0 %v370, 12
      %v632 = vpop.permute.xlu0 %631
      %633 = vrot.lane.b32.xlu0 %v372, 12
      %v634 = vpop.permute.xlu0 %633
      %635 = vrot.lane.b32.xlu0 %v375, 12
      %v636 = vpop.permute.xlu0 %635
      %637 = vrot.lane.b32.xlu0 %v377, 12
      %v638 = vpop.permute.xlu0 %637
      %639 = vrot.lane.b32.xlu0 %v380, 12
      %v640 = vpop.permute.xlu0 %639
      %641 = vrot.lane.b32.xlu0 %v382, 12
      %v642 = vpop.permute.xlu0 %641
      %643 = vrot.lane.b32.xlu0 %v580, 12
      %v644 = vpop.permute.xlu0 %643
      %645 = vrot.lane.b32.xlu0 %v582, 12
      %v646 = vpop.permute.xlu0 %645
      %vm679 = vcmask 31744
      %v680 = vsel %vm679, %v203, %v384
      %v681 = vsel %vm679, %v204, %v386
      %v682 = vsel %vm679, %v206, %v388
      %v683 = vsel %vm679, %v207, %v390
      %v684 = vsel %vm679, %v209, %v392
      %v685 = vsel %vm679, %v210, %v394
      %v686 = vsel %vm679, %v212, %v396
      %v687 = vsel %vm679, %v213, %v398
      %v688 = vsel %vm679, %v215, %v400
      %v689 = vsel %vm679, %v216, %v402
      %v690 = vsel %vm679, %v218, %v404
      %v691 = vsel %vm679, %v219, %v406
      %v692 = vsel %vm679, %v221, %v408
      %v693 = vsel %vm679, %v222, %v410
      %v694 = vsel %vm679, %v224, %v412
      %v695 = vsel %vm679, %v225, %v414
      %v696 = vsel %vm679, %v227, %v416
      %v697 = vsel %vm679, %v228, %v418
      %v698 = vsel %vm679, %v230, %v420
      %v699 = vsel %vm679, %v231, %v422
      %v700 = vsel %vm679, %v233, %v424
      %v701 = vsel %vm679, %v234, %v426
      %v702 = vsel %vm679, %v236, %v428
      %v703 = vsel %vm679, %v237, %v430
      %v704 = vsel %vm679, %v239, %v432
      %v705 = vsel %vm679, %v240, %v434
      %v706 = vsel %vm679, %v242, %v436
      %v707 = vsel %vm679, %v243, %v438
      %v708 = vsel %vm679, %v245, %v440
      %v709 = vsel %vm679, %v246, %v442
      %v710 = vsel %vm679, %v248, %v444
      %v711 = vsel %vm679, %v249, %v446
      %vm712 = vcmask 64512
      %v713 = vsel %vm712, %v680, %v482
      %v714 = vsel %vm712, %v681, %v484
      %v715 = vsel %vm712, %v682, %v486
      %v716 = vsel %vm712, %v683, %v488
      %v717 = vsel %vm712, %v684, %v490
      %v718 = vsel %vm712, %v685, %v492
      %v719 = vsel %vm712, %v686, %v494
      %v720 = vsel %vm712, %v687, %v496
      %v721 = vsel %vm712, %v688, %v498
      %v722 = vsel %vm712, %v689, %v500
      %v723 = vsel %vm712, %v690, %v502
      %v724 = vsel %vm712, %v691, %v504
      %v725 = vsel %vm712, %v692, %v506
      %v726 = vsel %vm712, %v693, %v508
      %v727 = vsel %vm712, %v694, %v510
      %v728 = vsel %vm712, %v695, %v512
      %v729 = vsel %vm712, %v696, %v514
      %v730 = vsel %vm712, %v697, %v516
      %v731 = vsel %vm712, %v698, %v518
      %v732 = vsel %vm712, %v699, %v520
      %v733 = vsel %vm712, %v700, %v522
      %v734 = vsel %vm712, %v701, %v524
      %v735 = vsel %vm712, %v702, %v526
      %v736 = vsel %vm712, %v703, %v528
      %v737 = vsel %vm712, %v704, %v530
      %v738 = vsel %vm712, %v705, %v532
      %v739 = vsel %vm712, %v706, %v534
      %v740 = vsel %vm712, %v707, %v536
      %v741 = vsel %vm712, %v708, %v538
      %v742 = vsel %vm712, %v709, %v540
      %v743 = vsel %vm712, %v710, %v542
      %v744 = vsel %vm712, %v711, %v544
      %vm745 = vcmask 97280
      %v746 = vsel %vm745, %v713, %v584
      %v747 = vsel %vm745, %v714, %v586
      %v748 = vsel %vm745, %v715, %v588
      %v749 = vsel %vm745, %v716, %v590
      %v750 = vsel %vm745, %v717, %v592
      %v751 = vsel %vm745, %v718, %v594
      %v752 = vsel %vm745, %v719, %v596
      %v753 = vsel %vm745, %v720, %v598
      %v754 = vsel %vm745, %v721, %v600
      %v755 = vsel %vm745, %v722, %v602
      %v756 = vsel %vm745, %v723, %v604
      %v757 = vsel %vm745, %v724, %v606
      %v758 = vsel %vm745, %v725, %v608
      %v759 = vsel %vm745, %v726, %v610
      %v760 = vsel %vm745, %v727, %v612
      %v761 = vsel %vm745, %v728, %v614
      %v762 = vsel %vm745, %v729, %v616
      %v763 = vsel %vm745, %v730, %v618
      %v764 = vsel %vm745, %v731, %v620
      %v765 = vsel %vm745, %v732, %v622
      %v766 = vsel %vm745, %v733, %v624
      %v767 = vsel %vm745, %v734, %v626
      %v768 = vsel %vm745, %v735, %v628
      %v769 = vsel %vm745, %v736, %v630
      %v770 = vsel %vm745, %v737, %v632
      %v771 = vsel %vm745, %v738, %v634
      %v772 = vsel %vm745, %v739, %v636
      %v773 = vsel %vm745, %v740, %v638
      %v774 = vsel %vm745, %v741, %v640
      %v775 = vsel %vm745, %v742, %v642
      %v776 = vsel %vm745, %v743, %v644
      %v777 = vsel %vm745, %v744, %v646
      %v778 = vld [vmem:[%s1] sm:$0xff]
      %v779 = vld [vmem:[%s1 + $0x8] sm:$0xff]
      %v780 = vld [vmem:[%s2] sm:$0x1]
      %v782 = vlaneseq
      %v783 = vshrl.u32 %v782, 7
      %v784 = vsub.s32 0, %v783
      %v785 = vrot.slane %v780, %v784
      %vm787 = vcmask 130048
      %v789 = vsel %vm787, %v746, 0
      %v792 = vsel %vm787, %v747, 0
      %v795 = vsel %vm787, %v748, 0
      %v798 = vsel %vm787, %v749, 0
      %v801 = vsel %vm787, %v750, 0
      %v804 = vsel %vm787, %v751, 0
      %v807 = vsel %vm787, %v752, 0
      %v810 = vsel %vm787, %v753, 0
      %v813 = vsel %vm787, %v754, 0
      %v816 = vsel %vm787, %v755, 0
      %v819 = vsel %vm787, %v756, 0
      %v822 = vsel %vm787, %v757, 0
      %v825 = vsel %vm787, %v758, 0
      %v828 = vsel %vm787, %v759, 0
      %v831 = vsel %vm787, %v760, 0
      %v834 = vsel %vm787, %v761, 0
      %v837 = vsel %vm787, %v762, 0
      %v840 = vsel %vm787, %v763, 0
      %v843 = vsel %vm787, %v764, 0
      %v846 = vsel %vm787, %v765, 0
      %v849 = vsel %vm787, %v766, 0
      %v852 = vsel %vm787, %v767, 0
      %v855 = vsel %vm787, %v768, 0
      %v858 = vsel %vm787, %v769, 0
      %v861 = vsel %vm787, %v770, 0
      %v864 = vsel %vm787, %v771, 0
      %v867 = vsel %vm787, %v772, 0
      %v870 = vsel %vm787, %v773, 0
      %v873 = vsel %vm787, %v774, 0
      %v876 = vsel %vm787, %v775, 0
      %v879 = vsel %vm787, %v776, 0
      %v882 = vsel %vm787, %v777, 0
      %884 = vmatprep.subr.mxu0 0.0
      %885 = vmatpush1.msra.mxu0 %v778
      %886 = vmatprep.subr.mxu0 0.0
      %887 = vmatpush1.msra.mxu0 %v779
      %888 = vmatprep.subr.mxu0 0.0
      %889 = vmatpush1.msra.mxu0 0.0
      %890 = vmatprep.subr.mxu0 0.0
      %891 = vmatpush1.msra.mxu0 0.0
      %892 = vmatprep.subr.mxu0 0.0
      %893 = vmatpush1.msra.mxu0 0.0
      %894 = vmatprep.subr.mxu0 0.0
      %895 = vmatpush1.msra.mxu0 0.0
      %896 = vmatprep.subr.mxu0 0.0
      %897 = vmatpush1.msra.mxu0 0.0
      %898 = vmatprep.subr.mxu0 0.0
      %899 = vmatpush1.msra.mxu0 0.0
      %900 = vmatprep.subr.mxu0 0.0
      %901 = vmatpush1.msra.mxu0 0.0
      %902 = vmatprep.subr.mxu0 0.0
      %903 = vmatpush1.msra.mxu0 0.0
      %904 = vmatprep.subr.mxu0 0.0
      %905 = vmatpush1.msra.mxu0 0.0
      %906 = vmatprep.subr.mxu0 0.0
      %907 = vmatpush1.msra.mxu0 0.0
      %908 = vmatprep.subr.mxu0 0.0
      %909 = vmatpush1.msra.mxu0 0.0
      %910 = vmatprep.subr.mxu0 0.0
      %911 = vmatpush1.msra.mxu0 0.0
      %912 = vmatprep.subr.mxu0 0.0
      %913 = vmatpush1.msra.mxu0 0.0
      %914 = vmatprep.subr.mxu0 0.0
      %915 = vmatpush1.msra.mxu0 0.0
      %916 = vmatprep.subr.mxu0 0.0
      %917 = vmatpush1.msra.mxu0 0.0
      %918 = vmatprep.subr.mxu0 0.0
      %919 = vmatpush1.msra.mxu0 0.0
      %920 = vmatprep.subr.mxu0 0.0
      %921 = vmatpush1.msra.mxu0 0.0
      %922 = vmatprep.subr.mxu0 0.0
      %923 = vmatpush1.msra.mxu0 0.0
      %924 = vmatprep.subr.mxu0 0.0
      %925 = vmatpush1.msra.mxu0 0.0
      %926 = vmatprep.subr.mxu0 0.0
      %927 = vmatpush1.msra.mxu0 0.0
      %928 = vmatprep.subr.mxu0 0.0
      %929 = vmatpush1.msra.mxu0 0.0
      %930 = vmatprep.subr.mxu0 0.0
      %931 = vmatpush1.msra.mxu0 0.0
      %932 = vmatprep.subr.mxu0 0.0
      %933 = vmatpush1.msra.mxu0 0.0
      %934 = vmatprep.subr.mxu0 0.0
      %935 = vmatpush1.msra.mxu0 0.0
      %936 = vmatprep.subr.mxu0 0.0
      %937 = vmatpush1.msra.mxu0 0.0
      %938 = vmatprep.subr.mxu0 0.0
      %939 = vmatpush1.msra.mxu0 0.0
      %940 = vmatprep.subr.mxu0 0.0
      %941 = vmatpush1.msra.mxu0 0.0
      %942 = vmatprep.subr.mxu0 0.0
      %943 = vmatpush1.msra.mxu0 0.0
      %944 = vmatprep.subr.mxu0 0.0
      %945 = vmatpush1.msra.mxu0 0.0
      %946 = vmatprep.subr.mxu0 0.0
      %947 = vmatpush1.msra.mxu0 0.0
      %948 = vmatprep.mubr.f32.mxu0 0.0
      %949 = vmatmul.mubr.f32.gmra.mrb[0].mxu0 %v789
      %v950 = vpop.f32.mrb[0].mxu0
      %v951 = vadd.f32 %v785, %v950
      %v952 = vpop.f32.mrb[0].mxu0
      %953 = vmatprep.mubr.f32.mxu0 0.0
      %954 = vmatmul.mubr.f32.gmra.mrb[0].mxu0 %v792
      %v955 = vpop.f32.mrb[0].mxu0
      %v956 = vadd.f32 %v785, %v955
      %v957 = vpop.f32.mrb[0].mxu0
      %958 = vmatprep.mubr.f32.mxu0 0.0
      %959 = vmatmul.mubr.f32.gmra.mrb[0].mxu0 %v795
      %v960 = vpop.f32.mrb[0].mxu0
      %v961 = vadd.f32 %v785, %v960
      %v962 = vpop.f32.mrb[0].mxu0
      %963 = vmatprep.mubr.f32.mxu0 0.0
      %964 = vmatmul.mubr.f32.gmra.mrb[0].mxu0 %v798
      %v965 = vpop.f32.mrb[0].mxu0
      %v966 = vadd.f32 %v785, %v965
      %v967 = vpop.f32.mrb[0].mxu0
      %968 = vmatprep.mubr.f32.mxu0 0.0
      %969 = vmatmul.mubr.f32.gmra.mrb[0].mxu0 %v801
      %v970 = vpop.f32.mrb[0].mxu0
      %v971 = vadd.f32 %v785, %v970
      %v972 = vpop.f32.mrb[0].mxu0
      %973 = vmatprep.mubr.f32.mxu0 0.0
      %974 = vmatmul.mubr.f32.gmra.mrb[0].mxu0 %v804
      %v975 = vpop.f32.mrb[0].mxu0
      %v976 = vadd.f32 %v785, %v975
      %v977 = vpop.f32.mrb[0].mxu0
      %978 = vmatprep.mubr.f32.mxu0 0.0
      %979 = vmatmul.mubr.f32.gmra.mrb[0].mxu0 %v807
      %v980 = vpop.f32.mrb[0].mxu0
      %v981 = vadd.f32 %v785, %v980
      %v982 = vpop.f32.mrb[0].mxu0
      %983 = vmatprep.mubr.f32.mxu0 0.0
      %984 = vmatmul.mubr.f32.gmra.mrb[0].mxu0 %v810
      %v985 = vpop.f32.mrb[0].mxu0
      %v986 = vadd.f32 %v785, %v985
      %v987 = vpop.f32.mrb[0].mxu0
      %988 = vmatprep.mubr.f32.mxu0 0.0
      %989 = vmatmul.mubr.f32.gmra.mrb[0].mxu0 %v813
      %v990 = vpop.f32.mrb[0].mxu0
      %v991 = vadd.f32 %v785, %v990
      %v992 = vpop.f32.mrb[0].mxu0
      %993 = vmatprep.mubr.f32.mxu0 0.0
      %994 = vmatmul.mubr.f32.gmra.mrb[0].mxu0 %v816
      %v995 = vpop.f32.mrb[0].mxu0
      %v996 = vadd.f32 %v785, %v995
      %v997 = vpop.f32.mrb[0].mxu0
      %998 = vmatprep.mubr.f32.mxu0 0.0
      %999 = vmatmul.mubr.f32.gmra.mrb[0].mxu0 %v819
      %v1000 = vpop.f32.mrb[0].mxu0
      %v1001 = vadd.f32 %v785, %v1000
      %v1002 = vpop.f32.mrb[0].mxu0
      %1003 = vmatprep.mubr.f32.mxu0 0.0
      %1004 = vmatmul.mubr.f32.gmra.mrb[0].mxu0 %v822
      %v1005 = vpop.f32.mrb[0].mxu0
      %v1006 = vadd.f32 %v785, %v1005
      %v1007 = vpop.f32.mrb[0].mxu0
      %1008 = vmatprep.mubr.f32.mxu0 0.0
      %1009 = vmatmul.mubr.f32.gmra.mrb[0].mxu0 %v825
      %v1010 = vpop.f32.mrb[0].mxu0
      %v1011 = vadd.f32 %v785, %v1010
      %v1012 = vpop.f32.mrb[0].mxu0
      %1013 = vmatprep.mubr.f32.mxu0 0.0
      %1014 = vmatmul.mubr.f32.gmra.mrb[0].mxu0 %v828
      %v1015 = vpop.f32.mrb[0].mxu0
      %v1016 = vadd.f32 %v785, %v1015
      %v1017 = vpop.f32.mrb[0].mxu0
      %1018 = vmatprep.mubr.f32.mxu0 0.0
      %1019 = vmatmul.mubr.f32.gmra.mrb[0].mxu0 %v831
      %v1020 = vpop.f32.mrb[0].mxu0
      %v1021 = vadd.f32 %v785, %v1020
      %v1022 = vpop.f32.mrb[0].mxu0
      %1023 = vmatprep.mubr.f32.mxu0 0.0
      %1024 = vmatmul.mubr.f32.gmra.mrb[0].mxu0 %v834
      %v1025 = vpop.f32.mrb[0].mxu0
      %v1026 = vadd.f32 %v785, %v1025
      %v1027 = vpop.f32.mrb[0].mxu0
      %1028 = vmatprep.mubr.f32.mxu0 0.0
      %1029 = vmatmul.mubr.f32.gmra.mrb[0].mxu0 %v837
      %v1030 = vpop.f32.mrb[0].mxu0
      %v1031 = vadd.f32 %v785, %v1030
      %v1032 = vpop.f32.mrb[0].mxu0
      %1033 = vmatprep.mubr.f32.mxu0 0.0
      %1034 = vmatmul.mubr.f32.gmra.mrb[0].mxu0 %v840
      %v1035 = vpop.f32.mrb[0].mxu0
      %v1036 = vadd.f32 %v785, %v1035
      %v1037 = vpop.f32.mrb[0].mxu0
      %1038 = vmatprep.mubr.f32.mxu0 0.0
      %1039 = vmatmul.mubr.f32.gmra.mrb[0].mxu0 %v843
      %v1040 = vpop.f32.mrb[0].mxu0
      %v1041 = vadd.f32 %v785, %v1040
      %v1042 = vpop.f32.mrb[0].mxu0
      %1043 = vmatprep.mubr.f32.mxu0 0.0
      %1044 = vmatmul.mubr.f32.gmra.mrb[0].mxu0 %v846
      %v1045 = vpop.f32.mrb[0].mxu0
      %v1046 = vadd.f32 %v785, %v1045
      %v1047 = vpop.f32.mrb[0].mxu0
      %1048 = vmatprep.mubr.f32.mxu0 0.0
      %1049 = vmatmul.mubr.f32.gmra.mrb[0].mxu0 %v849
      %v1050 = vpop.f32.mrb[0].mxu0
      %v1051 = vadd.f32 %v785, %v1050
      %v1052 = vpop.f32.mrb[0].mxu0
      %1053 = vmatprep.mubr.f32.mxu0 0.0
      %1054 = vmatmul.mubr.f32.gmra.mrb[0].mxu0 %v852
      %v1055 = vpop.f32.mrb[0].mxu0
      %v1056 = vadd.f32 %v785, %v1055
      %v1057 = vpop.f32.mrb[0].mxu0
      %1058 = vmatprep.mubr.f32.mxu0 0.0
      %1059 = vmatmul.mubr.f32.gmra.mrb[0].mxu0 %v855
      %v1060 = vpop.f32.mrb[0].mxu0
      %v1061 = vadd.f32 %v785, %v1060
      %v1062 = vpop.f32.mrb[0].mxu0
      %1063 = vmatprep.mubr.f32.mxu0 0.0
      %1064 = vmatmul.mubr.f32.gmra.mrb[0].mxu0 %v858
      %v1065 = vpop.f32.mrb[0].mxu0
      %v1066 = vadd.f32 %v785, %v1065
      %v1067 = vpop.f32.mrb[0].mxu0
      %1068 = vmatprep.mubr.f32.mxu0 0.0
      %1069 = vmatmul.mubr.f32.gmra.mrb[0].mxu0 %v861
      %v1070 = vpop.f32.mrb[0].mxu0
      %v1071 = vadd.f32 %v785, %v1070
      %v1072 = vpop.f32.mrb[0].mxu0
      %1073 = vmatprep.mubr.f32.mxu0 0.0
      %1074 = vmatmul.mubr.f32.gmra.mrb[0].mxu0 %v864
      %v1075 = vpop.f32.mrb[0].mxu0
      %v1076 = vadd.f32 %v785, %v1075
      %v1077 = vpop.f32.mrb[0].mxu0
      %1078 = vmatprep.mubr.f32.mxu0 0.0
      %1079 = vmatmul.mubr.f32.gmra.mrb[0].mxu0 %v867
      %v1080 = vpop.f32.mrb[0].mxu0
      %v1081 = vadd.f32 %v785, %v1080
      %v1082 = vpop.f32.mrb[0].mxu0
      %1083 = vmatprep.mubr.f32.mxu0 0.0
      %1084 = vmatmul.mubr.f32.gmra.mrb[0].mxu0 %v870
      %v1085 = vpop.f32.mrb[0].mxu0
      %v1086 = vadd.f32 %v785, %v1085
      %v1087 = vpop.f32.mrb[0].mxu0
      %1088 = vmatprep.mubr.f32.mxu0 0.0
      %1089 = vmatmul.mubr.f32.gmra.mrb[0].mxu0 %v873
      %v1090 = vpop.f32.mrb[0].mxu0
      %v1091 = vadd.f32 %v785, %v1090
      %v1092 = vpop.f32.mrb[0].mxu0
      %1093 = vmatprep.mubr.f32.mxu0 0.0
      %1094 = vmatmul.mubr.f32.gmra.mrb[0].mxu0 %v876
      %v1095 = vpop.f32.mrb[0].mxu0
      %v1096 = vadd.f32 %v785, %v1095
      %v1097 = vpop.f32.mrb[0].mxu0
      %1098 = vmatprep.mubr.f32.mxu0 0.0
      %1099 = vmatmul.mubr.f32.gmra.mrb[0].mxu0 %v879
      %v1100 = vpop.f32.mrb[0].mxu0
      %v1101 = vadd.f32 %v785, %v1100
      %v1102 = vpop.f32.mrb[0].mxu0
      %1103 = vmatprep.mubr.f32.mxu0 0.0
      %1104 = vmatmul.mubr.f32.gmra.mrb[0].mxu0 %v882
      %v1105 = vpop.f32.mrb[0].mxu0
      %v1106 = vadd.f32 %v785, %v1105
      %v1107 = vpop.f32.mrb[0].mxu0
      %1108 = vdwg.mxu0
      %1109 = vst.msk [vmem:[%s201] sm:$0xff] %vm712, %v951
      %1110 = vst.msk [vmem:[%s201 + $0x8] sm:$0xff] %vm712, %v956
      %1111 = vst.msk [vmem:[%s201 + $0x10] sm:$0xff] %vm712, %v961
      %1112 = vst.msk [vmem:[%s201 + $0x18] sm:$0xff] %vm712, %v966
      %1113 = vst.msk [vmem:[%s201 + $0x20] sm:$0xff] %vm712, %v971
      %1114 = vst.msk [vmem:[%s201 + $0x28] sm:$0xff] %vm712, %v976
      %1115 = vst.msk [vmem:[%s201 + $0x30] sm:$0xff] %vm712, %v981
      %1116 = vst.msk [vmem:[%s201 + $0x38] sm:$0xff] %vm712, %v986
      %1117 = vst.msk [vmem:[%s201 + $0x40] sm:$0xff] %vm712, %v991
      %1118 = vst.msk [vmem:[%s201 + $0x48] sm:$0xff] %vm712, %v996
      %1119 = vst.msk [vmem:[%s201 + $0x50] sm:$0xff] %vm712, %v1001
      %1120 = vst.msk [vmem:[%s201 + $0x58] sm:$0xff] %vm712, %v1006
      %1121 = vst.msk [vmem:[%s201 + $0x60] sm:$0xff] %vm712, %v1011
      %1122 = vst.msk [vmem:[%s201 + $0x68] sm:$0xff] %vm712, %v1016
      %1123 = vst.msk [vmem:[%s201 + $0x70] sm:$0xff] %vm712, %v1021
      %1124 = vst.msk [vmem:[%s201 + $0x78] sm:$0xff] %vm712, %v1026
      %1125 = vst.msk [vmem:[%s201 + $0x80] sm:$0xff] %vm712, %v1031
      %1126 = vst.msk [vmem:[%s201 + $0x88] sm:$0xff] %vm712, %v1036
      %1127 = vst.msk [vmem:[%s201 + $0x90] sm:$0xff] %vm712, %v1041
      %1128 = vst.msk [vmem:[%s201 + $0x98] sm:$0xff] %vm712, %v1046
      %1129 = vst.msk [vmem:[%s201 + $0xa0] sm:$0xff] %vm712, %v1051
      %1130 = vst.msk [vmem:[%s201 + $0xa8] sm:$0xff] %vm712, %v1056
      %1131 = vst.msk [vmem:[%s201 + $0xb0] sm:$0xff] %vm712, %v1061
      %1132 = vst.msk [vmem:[%s201 + $0xb8] sm:$0xff] %vm712, %v1066
      %1133 = vst.msk [vmem:[%s201 + $0xc0] sm:$0xff] %vm712, %v1071
      %1134 = vst.msk [vmem:[%s201 + $0xc8] sm:$0xff] %vm712, %v1076
      %1135 = vst.msk [vmem:[%s201 + $0xd0] sm:$0xff] %vm712, %v1081
      %1136 = vst.msk [vmem:[%s201 + $0xd8] sm:$0xff] %vm712, %v1086
      %1137 = vst.msk [vmem:[%s201 + $0xe0] sm:$0xff] %vm712, %v1091
      %1138 = vst.msk [vmem:[%s201 + $0xe8] sm:$0xff] %vm712, %v1096
      %1139 = vst.msk [vmem:[%s201 + $0xf0] sm:$0xff] %vm712, %v1101
      %1140 = vst.msk [vmem:[%s201 + $0xf8] sm:$0xff] %vm712, %v1106
      %s1141 = smul.u32 16, %s19
      %p1142 = scmp.lt.s32.totalorder %s18, 1
      %s1143 = scalar_select %p1142, %s18, 1
      %p1144 = scmp.lt.s32.totalorder %s1141, 15
      %s1145 = scalar_select %p1144, %s1141, 15
      %s1146 = smul.addr %s1145, 2
      %s1147 = smul.addr %s1143, 32
      %s1148 = sadd.s32 %s1146, %s1147
      %s1149 = smul.addr %s1148, 8
      %s1150 = scalar_lea.vmem %s3, %s1149
      // Predicated region
      $region33: #{upsample_conv_transpose.1} parent=31 // pred_check
        %p1151 = pneg %p116
      $region34: #{upsample_conv_transpose.1} parent=31 // pred_check_branch
        %1153 = sbr.rel (%p1151) target = $region36
      $region35: #{upsample_conv_transpose.1} parent=31 // pred_region
        %s1154 = smul.u32 16, %s19
      $region36: #{upsample_conv_transpose.1} parent=31 // pred_fallthru
        _
    $region32: #{upsample_conv_transpose.1} parent=5 // pred_fallthru
      _
    %p1155 = scmp.le.s32.totalorder 2, %s9
    // Predicated region
    $region37: #{upsample_conv_transpose.1} parent=5 // pred_check
      %p1156 = pneg %p1155
    $region38: #{upsample_conv_transpose.1} parent=5 // pred_check_branch
      %1158 = sbr.rel (%p1156) target = $region40
    $region39: #{upsample_conv_transpose.1} parent=5 // pred_region
      %s1159 = ssub.s32 %s9, 2
      // Predicated region
      $region41: #{upsample_conv_transpose.1} parent=39 // pred_check
        %p1160 = pneg %p122
      $region42: #{upsample_conv_transpose.1} parent=39 // pred_check_branch
        %1162 = sbr.rel (%p1160) target = $region44
      $region43: #{upsample_conv_transpose.1} parent=39 // pred_region
        %s1163 = smul.u32 16, %s21
        %p1164 = scmp.lt.s32.totalorder %s20, 1
        %s1165 = scalar_select %p1164, %s20, 1
        %p1166 = scmp.lt.s32.totalorder %s1163, 15
        %s1167 = scalar_select %p1166, %s1163, 15
        %s1168 = smul.addr %s1167, 2
        %s1169 = smul.addr %s1165, 32
        %s1170 = sadd.s32 %s1168, %s1169
        %s1171 = smul.addr %s1170, 8
        %s1172 = scalar_lea.vmem %s3, %s1171
      $region44: #{upsample_conv_transpose.1} parent=39 // pred_fallthru
        _
    $region40: #{upsample_conv_transpose.1} parent=5 // pred_fallthru
      _
  $region6: #{upsample_conv_transpose.1} parent=0 // loop_footer
    %s13 = sadd.s32 1, %s9
  $region7: #{upsample_conv_transpose.1} parent=0 // loop_footer_branch
    %8 = sbr.rel target = $region3
  $region8: #{upsample_conv_transpose.1} parent=0 // loop_exit
    _

</llo_original>
